<compile_context>
chip_gen: v6e
topology: v6e:2x2x1
jax: 0.10.0
libtpu: 0.0.40
codegen_flags: <defaults>
</compile_context>

<pallas_src>
import jax
import jax.numpy as jnp
from jax.experimental import pallas as pl
from jax.experimental.pallas import tpu as pltpu


def _round_up(a, b):
    return (a + b - 1) // b * b


def _int8_linear_kernel(x_ref, wq_ref, wscale_ref, b_ref, o_ref, xq_ref, xscale_ref):
    # x_ref:      [tm, K]  input dtype (native; quantized in f32 here)
    # wq_ref:     [K, tn]  bf16, integer values in [-127, 127]
    # wscale_ref: [1, tn]  f32 per-output-channel scale
    # b_ref:      [1, tn]  f32 bias
    # o_ref:      [tm, tn] output
    # xq_ref:     [tm, K]  bf16 scratch (quantized activations, reused across N tiles)
    # xscale_ref: [tm, 1]  f32 scratch (per-row dequant scale)

    # Quantize the activation tile only once per M-tile (j == 0); the x block index
    # does not change across j, so the tile stays resident and is not re-DMA'd.
    @pl.when(pl.program_id(1) == 0)
    def _():
        x = x_ref[...].astype(jnp.float32)
        amax = jnp.max(jnp.abs(x), axis=1, keepdims=True)               # [tm, 1]
        inv = jnp.where(amax > 0.0, 127.0 / amax, 1.0)                  # 1 recip per row (EUP)
        xscale_ref[...] = jnp.where(amax > 0.0, amax * (1.0 / 127.0), 1.0)
        # bf16 exactly represents integers in [-127, 127].
        xq_ref[...] = jnp.clip(jnp.round(x * inv), -127.0, 127.0).astype(jnp.bfloat16)

    # bf16 x bf16 -> f32 accumulation on the MXU. Exact: |values| <= 127, so the
    # products/sums stay far below 2^24. (On v5e/v6e an int8/i32 path is also valid;
    # bf16 is used here because v7x has no integer MXU.)
    acc = jnp.dot(xq_ref[...], wq_ref[...], preferred_element_type=jnp.float32)  # [tm, tn]

    out = acc * xscale_ref[...] * wscale_ref[...] + b_ref[...]
    o_ref[...] = out.astype(o_ref.dtype)


def _quantize_weight(weight):
    """Per-output-channel symmetric quantization of a [out, in] weight.

    Returns (w_q [in, out] bf16 with integer values, w_scale [1, out] f32)."""
    w = weight.astype(jnp.float32)                                       # [N, K]
    amax = jnp.max(jnp.abs(w), axis=1, keepdims=True)                    # [N, 1]
    inv = jnp.where(amax > 0.0, 127.0 / amax, 1.0)
    scale = jnp.where(amax > 0.0, amax * (1.0 / 127.0), 1.0)
    w_q = jnp.clip(jnp.round(w * inv), -127.0, 127.0).astype(jnp.bfloat16)
    return w_q.T, scale.T                                                # [K, N], [1, N]


def int8_linear(x, weight, bias=None):
    """x: [..., in_features]; weight: [out_features, in_features]; bias: [out_features]."""
    orig_shape = x.shape
    out_features, in_features = weight.shape
    x2d = x.reshape(-1, in_features)            # keep native dtype; no f32 promotion
    m = x2d.shape[0]
    out_dtype = x2d.dtype

    if bias is None:
        bias = jnp.zeros((out_features,), jnp.float32)

    # Weight is static: quantize once outside the kernel.
    w_q, w_scale = _quantize_weight(weight)     # [K, N] bf16, [1, N] f32
    b2d = bias.reshape(1, out_features).astype(jnp.float32)

    # MXU/lane-aligned tiles. K stays untiled (full reduction per block) so the
    # per-row activation absmax is computed over the entire K dimension.
    tm = min(256, _round_up(m, 8))
    tn = min(256, _round_up(out_features, 128))
    m_pad = _round_up(m, tm)
    n_pad = _round_up(out_features, tn)

    if m_pad != m:
        x2d = jnp.pad(x2d, ((0, m_pad - m), (0, 0)))
    if n_pad != out_features:
        dn = n_pad - out_features
        w_q = jnp.pad(w_q, ((0, 0), (0, dn)))
        w_scale = jnp.pad(w_scale, ((0, 0), (0, dn)), constant_values=1.0)
        b2d = jnp.pad(b2d, ((0, 0), (0, dn)))

    grid = (m_pad // tm, n_pad // tn)

    out = pl.pallas_call(
        _int8_linear_kernel,
        out_shape=jax.ShapeDtypeStruct((m_pad, n_pad), out_dtype),
        grid=grid,
        in_specs=[
            pl.BlockSpec((tm, in_features), lambda i, j: (i, 0)),   # x tile (resident over j)
            pl.BlockSpec((in_features, tn), lambda i, j: (0, j)),   # quantized weight tile
            pl.BlockSpec((1, tn), lambda i, j: (0, j)),             # weight scale
            pl.BlockSpec((1, tn), lambda i, j: (0, j)),             # bias
        ],
        out_specs=pl.BlockSpec((tm, tn), lambda i, j: (i, j)),
        scratch_shapes=[
            pltpu.VMEM((tm, in_features), jnp.bfloat16),            # quantized activations
            pltpu.VMEM((tm, 1), jnp.float32),                       # per-row dequant scale
        ],
        compiler_params=pltpu.CompilerParams(
            # M tiles are independent -> "parallel" (sharded across TCs on v7x);
            # N axis carries the activation-quant scratch dependency -> "arbitrary".
            dimension_semantics=("parallel", "arbitrary"),
            vmem_limit_bytes=48 * 1024 * 1024,
        ),
    )(x2d, w_q, w_scale, b2d)

    out = out[:m, :out_features]
    return out.reshape(*orig_shape[:-1], out_features)


def _reference(x, weight, bias):
    """Pure-JAX reference of the same int8 dynamic-quant linear."""
    x = x.astype(jnp.float32)
    w = weight.astype(jnp.float32)
    x_amax = jnp.max(jnp.abs(x), axis=-1, keepdims=True)
    x_inv = jnp.where(x_amax > 0.0, 127.0 / x_amax, 1.0)
    x_scale = jnp.where(x_amax > 0.0, x_amax / 127.0, 1.0)
    x_q = jnp.clip(jnp.round(x * x_inv), -127.0, 127.0)
    w_amax = jnp.max(jnp.abs(w), axis=-1, keepdims=True)          # per out-channel
    w_inv = jnp.where(w_amax > 0.0, 127.0 / w_amax, 1.0)
    w_scale = jnp.where(w_amax > 0.0, w_amax / 127.0, 1.0)
    w_q = jnp.clip(jnp.round(w * w_inv), -127.0, 127.0)
    acc = x_q @ w_q.T
    return acc * x_scale * w_scale.T + bias


if __name__ == "__main__":
    in_features = 32
    out_features = 64
    batch = 8

    key = jax.random.PRNGKey(0)
    kx, kw, kb = jax.random.split(key, 3)
    x = jax.random.normal(kx, (batch, in_features), dtype=jnp.float32)
    # Deterministic parameter init (synthetic; no checkpoint load).
    weight = jax.random.normal(kw, (out_features, in_features), dtype=jnp.float32) * 0.1
    bias = jax.random.normal(kb, (out_features,), dtype=jnp.float32) * 0.01

    out = int8_linear(x, weight, bias)
    out = jax.block_until_ready(out)

    ref = _reference(x, weight, bias)
    assert out.shape == (batch, out_features)
    assert jnp.allclose(out, ref, atol=1e-4, rtol=1e-4), (
        f"max abs diff {jnp.max(jnp.abs(out - ref))}")

    print("KERNEL_OK")
</pallas_src>

<mosaic_0001>
module attributes {stable_mosaic.version = 11 : i64} {
  func.func @_int8_linear_kernel(%arg0: i32, %arg1: i32, %arg2: memref<8x32xf32, #tpu.memory_space<vmem>>, %arg3: memref<32x128xbf16, #tpu.memory_space<vmem>>, %arg4: memref<1x128xf32, #tpu.memory_space<vmem>>, %arg5: memref<1x128xf32, #tpu.memory_space<vmem>>, %arg6: memref<8x128xf32, #tpu.memory_space<vmem>>, %arg7: memref<8x32xbf16, #tpu.memory_space<vmem>>, %arg8: memref<8x1xf32, #tpu.memory_space<vmem>>) attributes {dimension_semantics = [#tpu.dimension_semantics<parallel>, #tpu.dimension_semantics<arbitrary>], iteration_bounds = array<i64: 1, 1>, scalar_prefetch = 0 : i64, scratch_operands = 2 : i64, tpu.core_type = #tpu.core_type<tc>, window_params = [{transform_indices = @transform_0, window_bounds = array<i64: 8, 32>}, {transform_indices = @transform_1, window_bounds = array<i64: 32, 128>}, {transform_indices = @transform_2, window_bounds = array<i64: 1, 128>}, {transform_indices = @transform_3, window_bounds = array<i64: 1, 128>}, {transform_indices = @transform_4, window_bounds = array<i64: 8, 128>}]} {
    %c0_i32 = arith.constant 0 : i32
    %0 = arith.cmpi eq, %arg1, %c0_i32 : i32
    %1 = arith.extui %0 : i1 to i32
    %c0_i32_0 = arith.constant 0 : i32
    %2 = arith.cmpi ne, %1, %c0_i32_0 : i32
    scf.if %2 {
      %c0_12 = arith.constant 0 : index
      %c0_13 = arith.constant 0 : index
      %16 = vector.load %arg2[%c0_12, %c0_13] : memref<8x32xf32, #tpu.memory_space<vmem>>, vector<8x32xf32>
      %17 = math.absf %16 : vector<8x32xf32>
      %cst_14 = arith.constant dense<0xFF800000> : vector<8xf32>
      %18 = vector.multi_reduction <maximumf>, %17, %cst_14 [1] : vector<8x32xf32> to vector<8xf32>
      %19 = vector.shape_cast %18 : vector<8xf32> to vector<8x1xf32>
      %cst_15 = arith.constant 0.000000e+00 : f32
      %20 = vector.broadcast %cst_15 : f32 to vector<8x1xf32>
      %21 = arith.cmpf ogt, %19, %20 : vector<8x1xf32>
      %cst_16 = arith.constant 1.270000e+02 : f32
      %22 = vector.broadcast %cst_16 : f32 to vector<8x1xf32>
      %23 = arith.divf %22, %19 : vector<8x1xf32>
      %cst_17 = arith.constant 1.000000e+00 : f32
      %24 = vector.broadcast %cst_17 : f32 to vector<8x1xf32>
      %25 = arith.select %21, %23, %24 : vector<8x1xi1>, vector<8x1xf32>
      %cst_18 = arith.constant 0.000000e+00 : f32
      %26 = vector.broadcast %cst_18 : f32 to vector<8x1xf32>
      %27 = arith.cmpf ogt, %19, %26 : vector<8x1xf32>
      %cst_19 = arith.constant 0.00787401571 : f32
      %28 = vector.broadcast %cst_19 : f32 to vector<8x1xf32>
      %29 = arith.mulf %19, %28 : vector<8x1xf32>
      %cst_20 = arith.constant 1.000000e+00 : f32
      %30 = vector.broadcast %cst_20 : f32 to vector<8x1xf32>
      %31 = arith.select %27, %29, %30 : vector<8x1xi1>, vector<8x1xf32>
      %c0_21 = arith.constant 0 : index
      %c0_22 = arith.constant 0 : index
      %32 = vector.load %arg8[%c0_21, %c0_22] : memref<8x1xf32, #tpu.memory_space<vmem>>, vector<8x1xf32>
      tpu.vector_store %arg8[%c0_21, %c0_22], %31 {strides = array<i32>} : memref<8x1xf32, #tpu.memory_space<vmem>>, vector<8x1xf32>,
      %33 = vector.broadcast %25 : vector<8x1xf32> to vector<8x32xf32>
      %34 = arith.mulf %16, %33 : vector<8x32xf32>
      %35 = math.roundeven %34 : vector<8x32xf32>
      %cst_23 = arith.constant -1.270000e+02 : f32
      %cst_24 = arith.constant 1.270000e+02 : f32
      %36 = vector.broadcast %cst_23 : f32 to vector<8x32xf32>
      %37 = arith.maximumf %36, %35 : vector<8x32xf32>
      %38 = vector.broadcast %cst_24 : f32 to vector<8x32xf32>
      %39 = arith.minimumf %38, %37 : vector<8x32xf32>
      %40 = arith.truncf %39 : vector<8x32xf32> to vector<8x32xbf16>
      %c0_25 = arith.constant 0 : index
      %c0_26 = arith.constant 0 : index
      %41 = vector.load %arg7[%c0_25, %c0_26] : memref<8x32xbf16, #tpu.memory_space<vmem>>, vector<8x32xbf16>
      tpu.vector_store %arg7[%c0_25, %c0_26], %40 {strides = array<i32>} : memref<8x32xbf16, #tpu.memory_space<vmem>>, vector<8x32xbf16>,
    } else {
    }
    %c0 = arith.constant 0 : index
    %c0_1 = arith.constant 0 : index
    %3 = vector.load %arg7[%c0, %c0_1] : memref<8x32xbf16, #tpu.memory_space<vmem>>, vector<8x32xbf16>
    %c0_2 = arith.constant 0 : index
    %c0_3 = arith.constant 0 : index
    %4 = vector.load %arg3[%c0_2, %c0_3] : memref<32x128xbf16, #tpu.memory_space<vmem>>, vector<32x128xbf16>
    %cst = arith.constant dense<0.000000e+00> : vector<8x128xf32>
    %5 = tpu.matmul %3, %4, %cst {dimension_numbers = #tpu.dot_dimension_numbers<[1], [0], [0], [1], [0, 0, 1, 1], [], []>} : vector<8x32xbf16>, vector<32x128xbf16>, vector<8x128xf32> -> vector<8x128xf32>
    %c0_4 = arith.constant 0 : index
    %c0_5 = arith.constant 0 : index
    %6 = vector.load %arg8[%c0_4, %c0_5] : memref<8x1xf32, #tpu.memory_space<vmem>>, vector<8x1xf32>
    %7 = vector.broadcast %6 : vector<8x1xf32> to vector<8x128xf32>
    %8 = arith.mulf %5, %7 : vector<8x128xf32>
    %c0_6 = arith.constant 0 : index
    %c0_7 = arith.constant 0 : index
    %9 = vector.load %arg4[%c0_6, %c0_7] : memref<1x128xf32, #tpu.memory_space<vmem>>, vector<1x128xf32>
    %10 = vector.broadcast %9 : vector<1x128xf32> to vector<8x128xf32>
    %11 = arith.mulf %8, %10 : vector<8x128xf32>
    %c0_8 = arith.constant 0 : index
    %c0_9 = arith.constant 0 : index
    %12 = vector.load %arg5[%c0_8, %c0_9] : memref<1x128xf32, #tpu.memory_space<vmem>>, vector<1x128xf32>
    %13 = vector.broadcast %12 : vector<1x128xf32> to vector<8x128xf32>
    %14 = arith.addf %11, %13 : vector<8x128xf32>
    %c0_10 = arith.constant 0 : index
    %c0_11 = arith.constant 0 : index
    %15 = vector.load %arg6[%c0_10, %c0_11] : memref<8x128xf32, #tpu.memory_space<vmem>>, vector<8x128xf32>
    tpu.vector_store %arg6[%c0_10, %c0_11], %14 {strides = array<i32>} : memref<8x128xf32, #tpu.memory_space<vmem>>, vector<8x128xf32>,
    return
  }
  func.func @transform_0(%arg0: i32, %arg1: i32) -> (i32, i32) {
    %c0_i32 = arith.constant 0 : i32
    %c0_i32_0 = arith.constant 0 : i32
    return %arg0, %c0_i32 : i32, i32
  }
  func.func @transform_1(%arg0: i32, %arg1: i32) -> (i32, i32) {
    %c0_i32 = arith.constant 0 : i32
    %c0_i32_0 = arith.constant 0 : i32
    return %c0_i32, %arg1 : i32, i32
  }
  func.func @transform_2(%arg0: i32, %arg1: i32) -> (i32, i32) {
    %c0_i32 = arith.constant 0 : i32
    %c0_i32_0 = arith.constant 0 : i32
    return %c0_i32, %arg1 : i32, i32
  }
  func.func @transform_3(%arg0: i32, %arg1: i32) -> (i32, i32) {
    %c0_i32 = arith.constant 0 : i32
    %c0_i32_0 = arith.constant 0 : i32
    return %c0_i32, %arg1 : i32, i32
  }
  func.func @transform_4(%arg0: i32, %arg1: i32) -> (i32, i32) {
    %c0_i32 = arith.constant 0 : i32
    return %arg0, %arg1 : i32, i32
  }
}

</mosaic_0001>

<llo_original>
// kernel: tpu_custom_call.1
$region0: #{tpu_custom_call.1}
  #allocation0 [shape = 'u32[]', space=smem, size = 0x4, offset = 0x4, fixed_abs, tag = 'smem constant byte address 0x4 - core index']
  #allocation1 [shape = 'u32[144,128]{1,0:T(1,128)}', space=vmem, size = 0x12000, scoped, tag = 'internal scratch']
  #allocation2 [shape = 'bf16[8,32]{1,0:T(8,128)(2,1)}', space=vmem, size = 0x800, scoped, tag = 'scratch operand']
  #allocation3 [shape = 'f32[8,1]{1,0:T(8,128)}', space=vmem, size = 0x1000, scoped, tag = 'scratch operand']
  %s0 = inlined_call_operand.hbm [shape: f32[8,32], index: 0, kind: input, shape index: {}]
  %s1 = inlined_call_operand.hbm [shape: bf16[32,128], index: 1, kind: input, shape index: {}]
  %s2 = inlined_call_operand.vmem [shape: f32[1,128], index: 2, kind: input, shape index: {}]
  %s3 = inlined_call_operand.vmem [shape: f32[1,128], index: 3, kind: input, shape index: {}]
  %s4 = inlined_call_operand.hbm [shape: f32[8,128], index: 4, kind: output, shape index: {}]
  %s5 = sld [smem:[#allocation0]]
  $region38: #{tpu_custom_call.1} parent=0
    _
  %s7 = ssub.s32 1, %s5
  %s8 = scalar_select 0, %s7, %s5
  $region1: #{tpu_custom_call.1} parent=0
    #allocation4 [shape = 'u8[4096]{0}', space=vmem, size = 0x1000, scoped, tag = 'input window, operand 0, single buffered']
    #allocation5 [shape = 's32[1]{0}', space=sflag, size = 0x4, scoped, tag = 'scoped memory for tpu_custom_call.1']
    #allocation6 [shape = 's32[1]{0}', space=sflag, size = 0x4, scoped, tag = 'scoped memory for tpu_custom_call.1']
    #allocation7 [shape = 'u8[8192]{0}', space=vmem, size = 0x2000, scoped, tag = 'input window, operand 1, single buffered']
    #allocation8 [shape = 's32[1]{0}', space=sflag, size = 0x4, scoped, tag = 'scoped memory for tpu_custom_call.1']
    #allocation9 [shape = 'u8[4096]{0}', space=vmem, size = 0x1000, scoped, tag = 'output window, operand 0, single buffered']
    %9 = vsyncpa [#allocation5], 0
    %10 = vsyncpa [#allocation8], 0
    %11 = vsyncpa [#allocation6], 0
    // Predicated region
    $region2: #{tpu_custom_call.1} parent=1 // pred_check
      _
    $region3: #{tpu_custom_call.1} parent=1 // pred_check_branch
      %13 = sbr.rel (0) target = $region5
    $region4: #{tpu_custom_call.1} parent=1 // pred_region
      %s15 = ssub.s32 128, 128
      %16 = vsyncadd [#allocation5], %s15
      %s18 = sshll.u32 [#allocation4], 4
      %s19 = int_to_ptr.vmem [resolvable:$true] %s18
      %21 = dma.hbm_to_vmem [thread:$0]  %s0, 128, %s19, [#allocation5]
    $region5: #{tpu_custom_call.1} parent=1 // pred_fallthru
      _
    // Predicated region
    $region6: #{tpu_custom_call.1} parent=1 // pred_check
      _
    $region7: #{tpu_custom_call.1} parent=1 // pred_check_branch
      %23 = sbr.rel (0) target = $region9
    $region8: #{tpu_custom_call.1} parent=1 // pred_region
      %s25 = ssub.s32 256, 256
      %26 = vsyncadd [#allocation8], %s25
      %s27 = sshll.u32 [#allocation7], 4
      %s28 = int_to_ptr.vmem [resolvable:$true] %s27
      %33 = dma.hbm_to_vmem [thread:$0]  %s1, 256, %s28, [#allocation8], 64, 64, 4
    $region9: #{tpu_custom_call.1} parent=1 // pred_fallthru
      _
    // Predicated region
    $region10: #{tpu_custom_call.1} parent=1 // pred_check
      _
    $region11: #{tpu_custom_call.1} parent=1 // pred_check_branch
      %35 = sbr.rel (0) target = $region13
    $region12: #{tpu_custom_call.1} parent=1 // pred_region
      _
    $region13: #{tpu_custom_call.1} parent=1 // pred_fallthru
      _
    // Predicated region
    $region14: #{tpu_custom_call.1} parent=1 // pred_check
      _
    $region15: #{tpu_custom_call.1} parent=1 // pred_check_branch
      %37 = sbr.rel (0) target = $region17
    $region16: #{tpu_custom_call.1} parent=1 // pred_region
      _
    $region17: #{tpu_custom_call.1} parent=1 // pred_fallthru
      _
    // Predicated region
    $region18: #{tpu_custom_call.1} parent=1 // pred_check
      _
    $region19: #{tpu_custom_call.1} parent=1 // pred_check_branch
      %39 = sbr.rel (0) target = $region21
    $region20: #{tpu_custom_call.1} parent=1 // pred_region
      %40 = dma.done [#allocation5], 128
    $region21: #{tpu_custom_call.1} parent=1 // pred_fallthru
      _
    // Predicated region
    $region22: #{tpu_custom_call.1} parent=1 // pred_check
      _
    $region23: #{tpu_custom_call.1} parent=1 // pred_check_branch
      %42 = sbr.rel (0) target = $region25
    $region24: #{tpu_custom_call.1} parent=1 // pred_region
      %43 = dma.done [#allocation8], 256
    $region25: #{tpu_custom_call.1} parent=1 // pred_fallthru
      _
    %p45 = scmp.eq.s32.totalorder 0, 0
    // Predicated region
    $region26: #{tpu_custom_call.1} parent=1 // pred_check
      %p46 = pneg %p45
    $region27: #{tpu_custom_call.1} parent=1 // pred_check_branch
      %48 = sbr.rel (%p46) target = $region29
    $region28: #{tpu_custom_call.1} parent=1 // pred_region
      %v49 = vld [vmem:[#allocation4] sm:$0xff]
      %v50 = vand.u32 2147483647, %v49
      %vm51 = vcmask 261120
      %v52 = vsel %vm51, %v50, -inf
      %53 = vmax.xlane.f32.xlu0 %v52
      %v54 = vpop.xlane.xlu0 %53
      %vm55 = vcmp.gt.f32.partialorder %v54, 0.0
      %v56 = vrcp.pop %v54
      %v57 = vmul.f32 127.0, %v56
      %v58 = vsel %vm55, %v57, 1.0
      %v59 = vmul.f32 %v54, 0.007874016
      %v60 = vsel %vm55, %v59, 1.0
      %vm61 = vcmask 7168
      %62 = vst.msk [vmem:[#allocation3] sm:$0xff] %vm61, %v60
      %v63 = vmul.f32 %v49, %v58
      %v64 = vround.ne.pseudo %v63
      %v65 = vmax.f32 %v64, -127.0
      %v66 = vmin.f32 %v65, 127.0
      %v67 = vpack.c.bf16 %v66, %v66
      %vm68 = vcmask 257024
      %69 = vst.msk [vmem:[#allocation2] sm:$0xf] %vm68, %v67
    $region29: #{tpu_custom_call.1} parent=1 // pred_fallthru
      _
    %v70 = vld [vmem:[#allocation2] sm:$0xf]
    %v71 = vld [vmem:[#allocation7] sm:$0xf]
    %v72 = vld [vmem:[#allocation7 + $0x4] sm:$0xf]
    %v73 = vld [vmem:[#allocation7 + $0x8] sm:$0xf]
    %v74 = vld [vmem:[#allocation7 + $0xc] sm:$0xf]
    %v79 = vunpack.c.l.b16 %v71
    %v80 = vunpack.c.l.b16 %v72
    %v81 = vunpack.c.l.b16 %v73
    %v82 = vunpack.c.l.b16 %v74
    %v83 = vpack.c.b16 %v80, %v79
    %v84 = vpack.c.b16 %v82, %v81
    %vm87 = vcmask 261120
    %v89 = vsel %vm87, %v70, 0
    %91 = vmatprep.subr.bf16.mxu0 0
    %92 = vmatpush1.bf16.msra.mxu0 0
    %93 = vmatprep.subr.bf16.mxu0 0
    %94 = vmatpush1.bf16.msra.mxu0 0
    %95 = vmatprep.subr.bf16.mxu0 0
    %96 = vmatpush1.bf16.msra.mxu0 0
    %97 = vmatprep.subr.bf16.mxu0 0
    %98 = vmatpush1.bf16.msra.mxu0 0
    %99 = vmatprep.subr.bf16.mxu0 0
    %100 = vmatpush1.bf16.msra.mxu0 0
    %101 = vmatprep.subr.bf16.mxu0 0
    %102 = vmatpush1.bf16.msra.mxu0 0
    %103 = vmatprep.subr.bf16.mxu0 0
    %104 = vmatpush1.bf16.msra.mxu0 %v84
    %105 = vmatprep.subr.bf16.mxu0 0
    %106 = vmatpush1.bf16.msra.mxu0 %v83
    %107 = vmatprep.subr.bf16.mxu0 0
    %108 = vmatpush2.bf16.msra.mxu0 0
    %109 = vmatprep.subr.bf16.mxu0 0
    %110 = vmatpush2.bf16.msra.mxu0 0
    %111 = vmatprep.subr.bf16.mxu0 0
    %112 = vmatpush2.bf16.msra.mxu0 0
    %113 = vmatprep.subr.bf16.mxu0 0
    %114 = vmatpush2.bf16.msra.mxu0 0
    %115 = vmatprep.subr.bf16.mxu0 0
    %116 = vmatpush2.bf16.msra.mxu0 0
    %117 = vmatprep.subr.bf16.mxu0 0
    %118 = vmatpush2.bf16.msra.mxu0 0
    %119 = vmatprep.subr.bf16.mxu0 0
    %120 = vmatpush2.bf16.msra.mxu0 0
    %121 = vmatprep.subr.bf16.mxu0 0
    %122 = vmatpush2.bf16.msra.mxu0 0
    %123 = vmatprep.mubr.bf16.mxu0 0
    %124 = vmatmul.mubr.bf16.gmra.mxu0 %v89
    %v125 = vpop.f32.mrf.mxu0
    %v126 = vadd.f32 0.0, %v125
    %v127 = vpop.f32.mrf.mxu0
    %v128 = vpop.f32.mrf.mxu0
    %v129 = vpop.f32.mrf.mxu0
    %130 = vdwg.mxu0
    %v131 = vld [vmem:[#allocation3] sm:$0xff]
    %133 = vset.pattern.permute.xlu0 0
    %134 = vperm.xlu0 %133, %v131
    %v135 = vpop.permute.xlu0 %134
    %v137 = vmul.f32 %v126, %v135
    %v138 = vld [vmem:[%s2] sm:$0x1]
    %v140 = vlaneseq
    %v141 = vshrl.u32 %v140, 7
    %v142 = vsub.s32 0, %v141
    %v143 = vrot.slane %v138, %v142
    %v145 = vmul.f32 %v137, %v143
    %v146 = vld [vmem:[%s3] sm:$0x1]
    %v148 = vlaneseq
    %v149 = vshrl.u32 %v148, 7
    %v150 = vsub.s32 0, %v149
    %v151 = vrot.slane %v146, %v150
    %v153 = vadd.f32 %v145, %v151
    %154 = vst [vmem:[#allocation9] sm:$0xff] %v153
    // Predicated region
    $region30: #{tpu_custom_call.1} parent=1 // pred_check
      _
    $region31: #{tpu_custom_call.1} parent=1 // pred_check_branch
      %156 = sbr.rel (0) target = $region33
    $region32: #{tpu_custom_call.1} parent=1 // pred_region
      %s158 = ssub.s32 128, 128
      %159 = vsyncadd [#allocation6], %s158
      %s161 = sshll.u32 [#allocation9], 4
      %s162 = int_to_ptr.vmem [resolvable:$true] %s161
      %164 = dma.vmem_to_hbm [thread:$0]  %s162, 128, %s4, [#allocation6]
    $region33: #{tpu_custom_call.1} parent=1 // pred_fallthru
      _
    // Predicated region
    $region34: #{tpu_custom_call.1} parent=1 // pred_check
      _
    $region35: #{tpu_custom_call.1} parent=1 // pred_check_branch
      %166 = sbr.rel (0) target = $region37
    $region36: #{tpu_custom_call.1} parent=1 // pred_region
      %167 = dma.done [#allocation6], 128
    $region37: #{tpu_custom_call.1} parent=1 // pred_fallthru
      _
    %168 = vsyncpa [#allocation5], 1
    %169 = vsyncpa [#allocation8], 1
    %170 = vsyncpa [#allocation6], 1

</llo_original>
